<compile_context>
chip_gen: v6e
topology: v6e:2x2x1
jax: 0.10.0
libtpu: 0.0.40
codegen_flags: <defaults>
</compile_context>

<pallas_src>
import jax
import jax.numpy as jnp
from jax.experimental import pallas as pl
from jax.experimental.pallas import tpu as pltpu  # noqa: F401  (kept for TPU-specific tuning hooks)


def testnet_kernel(xa_ref, w1a_ref, w2b2_ref, o_ref):
    # fc1 with bias folded into the augmented weight: (B, 12) @ (12, 100) on the MXU.
    h = jnp.dot(xa_ref[...], w1a_ref[...], preferred_element_type=jnp.float32)
    # ReLU (VPU).
    h = jnp.maximum(h, 0.0)
    # fc2 (single output unit): broadcast-multiply + lane reduce on the VPU/XLU,
    # then add the scalar bias. No second MXU matmul, no in-kernel transposes.
    w2b2 = w2b2_ref[...]                       # (1, hidden + 1)
    hidden = w2b2.shape[-1] - 1
    w2 = w2b2[:, :hidden]                      # (1, hidden)
    b2 = w2b2[:, hidden:]                      # (1, 1)
    y = jnp.sum(h * w2, axis=-1, keepdims=True) + b2
    o_ref[...] = y.astype(o_ref.dtype)


def testnet_forward(x, w1, b1, w2, b2):
    """Forward pass of TestNet.

    x : (B, 11) float32
    w1: (100, 11), b1: (100,)   -- PyTorch nn.Linear(11, 100) layout
    w2: (1, 100),  b2: (1,)     -- PyTorch nn.Linear(100, 1) layout
    returns (B, 1) float32
    """
    B = x.shape[0]
    dt = jnp.float32

    # --- Host-side layout plumbing (done once, outside the kernel hot path) ---
    # Fold b1 into w1 via a ones column on x, and pre-transpose w1 to (in+1, out).
    x_aug = jnp.concatenate([x.astype(dt), jnp.ones((B, 1), dt)], axis=1)        # (B, 12)
    w1_aug = jnp.concatenate([w1.T.astype(dt), b1.reshape(1, -1).astype(dt)], 0)  # (12, 100)
    # Pack w2 and b2 into a single small row to cut the operand/DMA count.
    w2b2 = jnp.concatenate([w2.astype(dt), b2.reshape(1, 1).astype(dt)], axis=1)  # (1, 101)

    # Tiny shapes: every operand is a single full-array block resident in VMEM
    # (full-extent blocks are exempt from the (8,128) divisibility rule), grid=().
    full = lambda shape: pl.BlockSpec(shape, lambda: (0,) * len(shape))
    return pl.pallas_call(
        testnet_kernel,
        out_shape=jax.ShapeDtypeStruct((B, 1), dt),
        in_specs=[full(x_aug.shape), full(w1_aug.shape), full(w2b2.shape)],
        out_specs=full((B, 1)),
    )(x_aug, w1_aug, w2b2)
    # TODO(synk): if B grows large, add a batch grid (TB multiple of 128/256, batch
    # axis "parallel") and make the output lane-dense instead of (B, 1).


def _init_params(key):
    k1, k2, k3, k4 = jax.random.split(key, 4)
    # Deterministic synthetic init (PyTorch-like uniform fan-in scaling), PyTorch layouts.
    w1 = jax.random.uniform(k1, (100, 11), jnp.float32, -1.0, 1.0) / jnp.sqrt(11.0)
    b1 = jax.random.uniform(k2, (100,), jnp.float32, -1.0, 1.0) / jnp.sqrt(11.0)
    w2 = jax.random.uniform(k3, (1, 100), jnp.float32, -1.0, 1.0) / jnp.sqrt(100.0)
    b2 = jax.random.uniform(k4, (1,), jnp.float32, -1.0, 1.0) / jnp.sqrt(100.0)
    return w1, b1, w2, b2


if __name__ == "__main__":
    key = jax.random.PRNGKey(0)
    kx, kp, kw, kb = jax.random.split(key, 4)

    B = 8
    x = jax.random.normal(kx, (B, 11), jnp.float32)

    # Unused-in-forward module params W, b (created only for fidelity to __init__).
    W_unused = jax.random.normal(kw, (11, 11), jnp.float32)
    b_unused = jax.random.normal(kb, (11,), jnp.float32)

    w1, b1, w2, b2 = _init_params(kp)

    out = testnet_forward(x, w1, b1, w2, b2)
    out = jax.block_until_ready(out)

    # Pure-JAX reference check against the original (untransformed) parameters.
    ref = jnp.maximum(x @ w1.T + b1, 0.0) @ w2.T + b2
    assert out.shape == (B, 1)
    assert jnp.allclose(out, ref, atol=1e-5, rtol=1e-5)

    print("KERNEL_OK")
</pallas_src>

<mosaic_0001>
module attributes {stable_mosaic.version = 11 : i64} {
  func.func @testnet_kernel(%arg0: memref<8x12xf32, #tpu.memory_space<vmem>>, %arg1: memref<12x100xf32, #tpu.memory_space<vmem>>, %arg2: memref<1x101xf32, #tpu.memory_space<vmem>>, %arg3: memref<8x1xf32, #tpu.memory_space<vmem>>) attributes {dimension_semantics = [], scalar_prefetch = 0 : i64, scratch_operands = 0 : i64, tpu.core_type = #tpu.core_type<tc>} {
    %c0 = arith.constant 0 : index
    %c0_0 = arith.constant 0 : index
    %0 = vector.load %arg0[%c0, %c0_0] : memref<8x12xf32, #tpu.memory_space<vmem>>, vector<8x12xf32>
    %c0_1 = arith.constant 0 : index
    %c0_2 = arith.constant 0 : index
    %1 = vector.load %arg1[%c0_1, %c0_2] : memref<12x100xf32, #tpu.memory_space<vmem>>, vector<12x100xf32>
    %cst = arith.constant dense<0.000000e+00> : vector<8x100xf32>
    %2 = tpu.matmul %0, %1, %cst {dimension_numbers = #tpu.dot_dimension_numbers<[1], [0], [0], [1], [0, 0, 1, 1], [], []>} : vector<8x12xf32>, vector<12x100xf32>, vector<8x100xf32> -> vector<8x100xf32>
    %cst_3 = arith.constant 0.000000e+00 : f32
    %3 = vector.broadcast %cst_3 : f32 to vector<8x100xf32>
    %4 = arith.maximumf %2, %3 : vector<8x100xf32>
    %c0_4 = arith.constant 0 : index
    %c0_5 = arith.constant 0 : index
    %5 = vector.load %arg2[%c0_4, %c0_5] : memref<1x101xf32, #tpu.memory_space<vmem>>, vector<1x101xf32>
    %6 = vector.extract_strided_slice %5 {offsets = [0, 0], sizes = [1, 100], strides = [1, 1]} : vector<1x101xf32> to vector<1x100xf32>
    %7 = vector.extract_strided_slice %5 {offsets = [0, 100], sizes = [1, 1], strides = [1, 1]} : vector<1x101xf32> to vector<1x1xf32>
    %8 = vector.broadcast %6 : vector<1x100xf32> to vector<8x100xf32>
    %9 = arith.mulf %4, %8 : vector<8x100xf32>
    %cst_6 = arith.constant dense<0.000000e+00> : vector<8xf32>
    %10 = vector.multi_reduction <add>, %9, %cst_6 [1] : vector<8x100xf32> to vector<8xf32>
    %11 = vector.shape_cast %10 : vector<8xf32> to vector<8x1xf32>
    %12 = vector.broadcast %7 : vector<1x1xf32> to vector<8x1xf32>
    %13 = arith.addf %11, %12 : vector<8x1xf32>
    %c0_7 = arith.constant 0 : index
    %c0_8 = arith.constant 0 : index
    %14 = vector.load %arg3[%c0_7, %c0_8] : memref<8x1xf32, #tpu.memory_space<vmem>>, vector<8x1xf32>
    tpu.vector_store %arg3[%c0_7, %c0_8], %13 {strides = array<i32>} : memref<8x1xf32, #tpu.memory_space<vmem>>, vector<8x1xf32>,
    return
  }
}

</mosaic_0001>

<llo_original>
// kernel: tpu_custom_call.1
$region0: #{tpu_custom_call.1}
  #allocation0 [shape = 'u32[]', space=smem, size = 0x4, offset = 0x4, fixed_abs, tag = 'smem constant byte address 0x4 - core index']
  #allocation1 [shape = 'u32[144,128]{1,0:T(1,128)}', space=vmem, size = 0x12000, scoped, tag = 'internal scratch']
  %s0 = inlined_call_operand.hbm [shape: f32[8,12], index: 0, kind: input, shape index: {}]
  %s1 = inlined_call_operand.hbm [shape: f32[12,100], index: 1, kind: input, shape index: {}]
  %s2 = inlined_call_operand.vmem [shape: f32[1,101], index: 2, kind: input, shape index: {}]
  %s3 = inlined_call_operand.vmem [shape: f32[8,1], index: 3, kind: output, shape index: {}]
  %s4 = sld [smem:[#allocation0]]
  $region30: #{tpu_custom_call.1} parent=0
    _
  %s6 = ssub.s32 1, %s4
  %s7 = scalar_select 0, %s6, %s4
  $region1: #{tpu_custom_call.1} parent=0
    #allocation2 [shape = 'u8[4096]{0}', space=vmem, size = 0x1000, scoped, tag = 'input window, operand 0, single buffered']
    #allocation3 [shape = 's32[1]{0}', space=sflag, size = 0x4, scoped, tag = 'scoped memory for tpu_custom_call.1']
    #allocation4 [shape = 'u8[8192]{0}', space=vmem, size = 0x2000, scoped, tag = 'input window, operand 1, single buffered']
    #allocation5 [shape = 's32[1]{0}', space=sflag, size = 0x4, scoped, tag = 'scoped memory for tpu_custom_call.1']
    %8 = vsyncpa [#allocation3], 0
    %9 = vsyncpa [#allocation5], 0
    // Predicated region
    $region2: #{tpu_custom_call.1} parent=1 // pred_check
      _
    $region3: #{tpu_custom_call.1} parent=1 // pred_check_branch
      %11 = sbr.rel (0) target = $region5
    $region4: #{tpu_custom_call.1} parent=1 // pred_region
      %s13 = ssub.s32 128, 128
      %14 = vsyncadd [#allocation3], %s13
      %s16 = sshll.u32 [#allocation2], 4
      %s17 = int_to_ptr.vmem [resolvable:$true] %s16
      %19 = dma.hbm_to_vmem [thread:$0]  %s0, 128, %s17, [#allocation3]
    $region5: #{tpu_custom_call.1} parent=1 // pred_fallthru
      _
    // Predicated region
    $region6: #{tpu_custom_call.1} parent=1 // pred_check
      _
    $region7: #{tpu_custom_call.1} parent=1 // pred_check_branch
      %21 = sbr.rel (0) target = $region9
    $region8: #{tpu_custom_call.1} parent=1 // pred_region
      %s23 = ssub.s32 256, 256
      %24 = vsyncadd [#allocation5], %s23
      %s25 = sshll.u32 [#allocation4], 4
      %s26 = int_to_ptr.vmem [resolvable:$true] %s25
      %31 = dma.hbm_to_vmem [thread:$0]  %s1, 256, %s26, [#allocation5], 128, 128, 8
    $region9: #{tpu_custom_call.1} parent=1 // pred_fallthru
      _
    // Predicated region
    $region10: #{tpu_custom_call.1} parent=1 // pred_check
      _
    $region11: #{tpu_custom_call.1} parent=1 // pred_check_branch
      %33 = sbr.rel (0) target = $region13
    $region12: #{tpu_custom_call.1} parent=1 // pred_region
      _
    $region13: #{tpu_custom_call.1} parent=1 // pred_fallthru
      _
    // Predicated region
    $region14: #{tpu_custom_call.1} parent=1 // pred_check
      _
    $region15: #{tpu_custom_call.1} parent=1 // pred_check_branch
      %35 = sbr.rel (0) target = $region17
    $region16: #{tpu_custom_call.1} parent=1 // pred_region
      %36 = dma.done [#allocation3], 128
    $region17: #{tpu_custom_call.1} parent=1 // pred_fallthru
      _
    // Predicated region
    $region18: #{tpu_custom_call.1} parent=1 // pred_check
      _
    $region19: #{tpu_custom_call.1} parent=1 // pred_check_branch
      %38 = sbr.rel (0) target = $region21
    $region20: #{tpu_custom_call.1} parent=1 // pred_region
      %39 = dma.done [#allocation5], 256
    $region21: #{tpu_custom_call.1} parent=1 // pred_fallthru
      _
    %v40 = vld [vmem:[#allocation2] sm:$0xff]
    %v41 = vld [vmem:[#allocation4] sm:$0xff]
    %v42 = vld [vmem:[#allocation4 + $0x8] sm:$0xf]
    %vm43 = vcmask 97280
    %v45 = vsel %vm43, %v40, 0
    %vm47 = vcmask 1043456
    %v49 = vsel %vm47, %v42, 0
    %51 = vmatprep.subr.mxu0 0.0
    %52 = vmatpush1.msra.mxu0 0.0
    %53 = vmatprep.subr.mxu0 0.0
    %54 = vmatpush1.msra.mxu0 0.0
    %55 = vmatprep.subr.mxu0 0.0
    %56 = vmatpush1.msra.mxu0 0.0
    %57 = vmatprep.subr.mxu0 0.0
    %58 = vmatpush1.msra.mxu0 0.0
    %59 = vmatprep.subr.mxu0 0.0
    %60 = vmatpush1.msra.mxu0 0.0
    %61 = vmatprep.subr.mxu0 0.0
    %62 = vmatpush1.msra.mxu0 0.0
    %63 = vmatprep.subr.mxu0 0.0
    %64 = vmatpush1.msra.mxu0 0.0
    %65 = vmatprep.subr.mxu0 0.0
    %66 = vmatpush1.msra.mxu0 0.0
    %67 = vmatprep.subr.mxu0 0.0
    %68 = vmatpush1.msra.mxu0 0.0
    %69 = vmatprep.subr.mxu0 0.0
    %70 = vmatpush1.msra.mxu0 0.0
    %71 = vmatprep.subr.mxu0 0.0
    %72 = vmatpush1.msra.mxu0 0.0
    %73 = vmatprep.subr.mxu0 0.0
    %74 = vmatpush1.msra.mxu0 0.0
    %75 = vmatprep.subr.mxu0 0.0
    %76 = vmatpush1.msra.mxu0 0.0
    %77 = vmatprep.subr.mxu0 0.0
    %78 = vmatpush1.msra.mxu0 0.0
    %79 = vmatprep.subr.mxu0 0.0
    %80 = vmatpush1.msra.mxu0 %v49
    %81 = vmatprep.subr.mxu0 0.0
    %82 = vmatpush1.msra.mxu0 %v41
    %83 = vmatprep.subr.mxu0 0.0
    %84 = vmatpush2.msra.mxu0 0.0
    %85 = vmatprep.subr.mxu0 0.0
    %86 = vmatpush2.msra.mxu0 0.0
    %87 = vmatprep.subr.mxu0 0.0
    %88 = vmatpush2.msra.mxu0 0.0
    %89 = vmatprep.subr.mxu0 0.0
    %90 = vmatpush2.msra.mxu0 0.0
    %91 = vmatprep.subr.mxu0 0.0
    %92 = vmatpush2.msra.mxu0 0.0
    %93 = vmatprep.subr.mxu0 0.0
    %94 = vmatpush2.msra.mxu0 0.0
    %95 = vmatprep.subr.mxu0 0.0
    %96 = vmatpush2.msra.mxu0 0.0
    %97 = vmatprep.subr.mxu0 0.0
    %98 = vmatpush2.msra.mxu0 0.0
    %99 = vmatprep.subr.mxu0 0.0
    %100 = vmatpush2.msra.mxu0 0.0
    %101 = vmatprep.subr.mxu0 0.0
    %102 = vmatpush2.msra.mxu0 0.0
    %103 = vmatprep.subr.mxu0 0.0
    %104 = vmatpush2.msra.mxu0 0.0
    %105 = vmatprep.subr.mxu0 0.0
    %106 = vmatpush2.msra.mxu0 0.0
    %107 = vmatprep.subr.mxu0 0.0
    %108 = vmatpush2.msra.mxu0 0.0
    %109 = vmatprep.subr.mxu0 0.0
    %110 = vmatpush2.msra.mxu0 0.0
    %111 = vmatprep.subr.mxu0 0.0
    %112 = vmatpush2.msra.mxu0 0.0
    %113 = vmatprep.subr.mxu0 0.0
    %114 = vmatpush2.msra.mxu0 0.0
    %115 = vmatprep.mubr.f32.mxu0 0.0
    %116 = vmatmul.mubr.f32.gmra.mxu0 %v45
    %v117 = vpop.f32.mrf.mxu0
    %v118 = vadd.f32 0.0, %v117
    %v119 = vpop.f32.mrf.mxu0
    %120 = vdwg.mxu0
    %v121 = vmax.f32 %v118, 0.0
    %v122 = vld [vmem:[%s2] sm:$0x1]
    %v124 = vlaneseq
    %v125 = vshrl.u32 %v124, 7
    %v126 = vsub.s32 0, %v125
    %v127 = vrot.slane %v122, %v126
    %v129 = vmul.f32 %v121, %v127
    %vm130 = vcmask 818176
    %v131 = vsel %vm130, %v129, 0.0
    %132 = vadd.xlane.f32.xlu0 %v131
    %v133 = vpop.xlane.xlu0 %132
    %v134 = vadd.f32 %v133, %v127
    %136 = vrot.lane.b32.xlu0 %v134, 28
    %v137 = vpop.permute.xlu0 %136
    %vm139 = vcmask 7168
    %140 = vst.msk [vmem:[%s3] sm:$0xff] %vm139, %v137
    // Predicated region
    $region22: #{tpu_custom_call.1} parent=1 // pred_check
      _
    $region23: #{tpu_custom_call.1} parent=1 // pred_check_branch
      %142 = sbr.rel (0) target = $region25
    $region24: #{tpu_custom_call.1} parent=1 // pred_region
      _
    $region25: #{tpu_custom_call.1} parent=1 // pred_fallthru
      _
    // Predicated region
    $region26: #{tpu_custom_call.1} parent=1 // pred_check
      _
    $region27: #{tpu_custom_call.1} parent=1 // pred_check_branch
      %144 = sbr.rel (0) target = $region29
    $region28: #{tpu_custom_call.1} parent=1 // pred_region
      _
    $region29: #{tpu_custom_call.1} parent=1 // pred_fallthru
      _
    %145 = vsyncpa [#allocation3], 1
    %146 = vsyncpa [#allocation5], 1

</llo_original>
